<compile_context>
chip_gen: v7x
topology: tpu7x:2x2x1
jax: 0.10.0
libtpu: 0.0.40
codegen_flags: <defaults>
</compile_context>

<pallas_src>
import math

import jax
import jax.numpy as jnp
from jax.experimental import pallas as pl
from jax.experimental.pallas import tpu as pltpu

_C0 = math.sqrt(2.0 / math.pi)
_C1 = _C0 * 0.044715

_LANE = 128
_MIN_SPLIT_BYTES = 2 * 1024 * 1024  # force >=2 grid steps above this (v7x megacore)


def _tpu_tile_params():
    """Generation-aware (tile_bytes, vmem_limit_bytes), with a safe fallback."""
    tile_bytes = 4 * 1024 * 1024
    vmem_limit = 32 * 1024 * 1024
    try:
        info = pltpu.get_tpu_info()
        vmem_cap = int(getattr(info, "vmem_capacity_bytes", 0) or 0)
        if vmem_cap >= 100 * 1024 * 1024:
            # 128 MiB VMEM parts (v5e/v6e): bigger tiles are free headroom.
            tile_bytes = 8 * 1024 * 1024
            vmem_limit = 64 * 1024 * 1024
        elif vmem_cap > 0:
            # 64 MiB/TC parts (v7x-class): 2 bufs x (in+out) x 8 MiB = 32 MiB.
            tile_bytes = 8 * 1024 * 1024
            vmem_limit = 48 * 1024 * 1024
    except Exception:
        pass
    return tile_bytes, vmem_limit


def _gelu_kernel(x_ref, o_ref):
    x = x_ref[...]
    c0 = jnp.asarray(_C0, dtype=x.dtype)
    c1 = jnp.asarray(_C1, dtype=x.dtype)
    half = jnp.asarray(0.5, dtype=x.dtype)
    one = jnp.asarray(1.0, dtype=x.dtype)
    inner = x * (c0 + c1 * x * x)  # == sqrt(2/pi) * (x + 0.044715*x^3)
    # jnp.tanh maps to a single EUP op on TPU; exactly one transcendental per
    # element keeps the kernel HBM-bound (sigmoid rewrite left as a follow-up
    # only if a bundle dump shows tanh decomposing).
    o_ref[...] = half * x * (one + jnp.tanh(inner))


def _pick_width(n, pack):
    """Widest lane-dense width that divides n, preferring full sublane packs."""
    candidates = [w for w in (4096, 2048, 1024, 512, 256, 128) if n % w == 0]
    if not candidates:
        return None
    for w in candidates:
        if (n // w) % pack == 0:
            return w  # rows fill whole sublane packs -> full vregs
    return candidates[-1]  # narrowest -> most rows -> best vreg fill


def _call_gelu(x, block_shape, grid, index_map, vmem_limit, donate):
    return pl.pallas_call(
        _gelu_kernel,
        out_shape=jax.ShapeDtypeStruct(x.shape, x.dtype),
        grid_spec=pltpu.PrefetchScalarGridSpec(
            num_scalar_prefetch=0,
            grid=grid,
            in_specs=[pl.BlockSpec(block_shape, index_map)],
            out_specs=pl.BlockSpec(block_shape, index_map),
        ),
        compiler_params=pltpu.CompilerParams(
            dimension_semantics=("parallel",),
            vmem_limit_bytes=vmem_limit,
        ),
        input_output_aliases=({0: 0} if donate else {}),
    )(x)


def gelu_pallas(x: jax.Array, *, donate_input: bool = False) -> jax.Array:
    """Tanh-approx GELU matching the PyTorch module's forward."""
    orig_shape = x.shape
    n = x.size
    if n == 0:
        return x
    itemsize = jnp.dtype(x.dtype).itemsize
    pack = {4: 8, 2: 16, 1: 32}.get(itemsize, 8)  # sublane pack per dtype
    tile_bytes, vmem_limit = _tpu_tile_params()
    total_bytes = n * itemsize

    flat = x.reshape(-1)  # contiguous reshape: free

    width = _pick_width(n, pack) if n % _LANE == 0 else None

    if width is not None:
        # -------- zero-copy 2-D lane-dense path (n % 128 == 0) --------
        rows = n // width
        x2d = flat.reshape(rows, width)
        target_rows = max(pack, (tile_bytes // (width * itemsize)) // pack * pack)
        num_blocks = pl.cdiv(rows, target_rows)
        if total_bytes > _MIN_SPLIT_BYTES and rows > pack:
            num_blocks = max(num_blocks, 2)  # keep both v7x TCs busy
        if num_blocks <= 1:
            block_rows = rows  # block == full dim -> always legal
        else:
            block_rows = pl.cdiv(pl.cdiv(rows, num_blocks), pack) * pack
        grid = (pl.cdiv(rows, block_rows),)
        out2d = _call_gelu(x2d, (block_rows, width), grid, lambda i: (i, 0),
                           vmem_limit, donate_input)
        return out2d.reshape(orig_shape)

    # -------- zero-copy 1-D ragged path (n % 128 != 0) --------
    # No wrapper-side pad or slice.  Small inputs: single full-array block.
    # Large inputs: multiple-of-1024-element blocks; Pallas masks the ragged
    # last block's load/store (GELU(0)=0, masked store -> safe).
    chunk = 8 * _LANE  # 1024-element granularity (full sublane packs of lanes)
    block_elems = max(chunk, (tile_bytes // itemsize) // chunk * chunk)
    num_blocks = pl.cdiv(n, block_elems)
    if total_bytes > _MIN_SPLIT_BYTES:
        num_blocks = max(num_blocks, 2)
    if num_blocks <= 1:
        block_elems = n  # block == full array dim -> no divisibility needed
    else:
        block_elems = pl.cdiv(pl.cdiv(n, num_blocks), chunk) * chunk
    grid = (pl.cdiv(n, block_elems),)
    out1d = _call_gelu(flat, (block_elems,), grid, lambda i: (i,),
                       vmem_limit, donate_input)
    return out1d.reshape(orig_shape)


def gelu_reference(x: jax.Array) -> jax.Array:
    c = jnp.asarray(_C0, dtype=x.dtype)
    return 0.5 * x * (1.0 + jnp.tanh(c * (x + 0.044715 * jnp.power(x, 3))))


if __name__ == "__main__":
    key = jax.random.PRNGKey(0)

    # Small NCHW activation (n % 128 == 0 -> zero-copy 2-D lane-dense path,
    # sublane-aware width pick gives an (8, 256) slab).
    x = jax.random.normal(key, (2, 4, 16, 16), dtype=jnp.float32)
    y = jax.block_until_ready(gelu_pallas(x))
    y_ref = gelu_reference(x)
    assert y.shape == x.shape and y.dtype == x.dtype
    assert jnp.allclose(y, y_ref, atol=1e-5, rtol=1e-5)

    # The script-level input from the PyTorch spec: x = linspace(-3, 3, 100)
    # (ragged size -> zero-copy 1-D single-block path, no pad / no slice).
    x_lin = jnp.linspace(-3.0, 3.0, 100, dtype=jnp.float32)
    y_lin = jax.block_until_ready(gelu_pallas(x_lin))
    assert y_lin.shape == x_lin.shape and y_lin.dtype == x_lin.dtype
    assert jnp.allclose(y_lin, gelu_reference(x_lin), atol=1e-5, rtol=1e-5)

    # Medium activation (4 MiB) to exercise the multi-block / megacore split.
    x_big = jax.random.normal(key, (8, 8, 128, 128), dtype=jnp.float32)
    y_big = jax.block_until_ready(gelu_pallas(x_big))
    assert jnp.allclose(y_big, gelu_reference(x_big), atol=1e-5, rtol=1e-5)

    print("KERNEL_OK")
</pallas_src>

<mosaic_0001>
module attributes {stable_mosaic.version = 11 : i64} {
  func.func @_gelu_kernel(%arg0: i32, %arg1: memref<8x256xf32, #tpu.memory_space<vmem>>, %arg2: memref<8x256xf32, #tpu.memory_space<vmem>>) attributes {dimension_semantics = [#tpu.dimension_semantics<parallel>], iteration_bounds = array<i64: 1>, scalar_prefetch = 0 : i64, scratch_operands = 0 : i64, tpu.core_type = #tpu.core_type<tc>, window_params = [{transform_indices = @transform_0, window_bounds = array<i64: 8, 256>}, {transform_indices = @transform_1, window_bounds = array<i64: 8, 256>}]} {
    %c0 = arith.constant 0 : index
    %c0_0 = arith.constant 0 : index
    %0 = vector.load %arg1[%c0, %c0_0] : memref<8x256xf32, #tpu.memory_space<vmem>>, vector<8x256xf32>
    %cst = arith.constant 0.0356774069 : f32
    %1 = vector.broadcast %cst : f32 to vector<8x256xf32>
    %2 = arith.mulf %1, %0 : vector<8x256xf32>
    %3 = arith.mulf %2, %0 : vector<8x256xf32>
    %cst_1 = arith.constant 0.797884583 : f32
    %4 = vector.broadcast %cst_1 : f32 to vector<8x256xf32>
    %5 = arith.addf %4, %3 : vector<8x256xf32>
    %6 = arith.mulf %0, %5 : vector<8x256xf32>
    %cst_2 = arith.constant 5.000000e-01 : f32
    %7 = vector.broadcast %cst_2 : f32 to vector<8x256xf32>
    %8 = arith.mulf %7, %0 : vector<8x256xf32>
    %9 = math.tanh %6 : vector<8x256xf32>
    %cst_3 = arith.constant 1.000000e+00 : f32
    %10 = vector.broadcast %cst_3 : f32 to vector<8x256xf32>
    %11 = arith.addf %10, %9 : vector<8x256xf32>
    %12 = arith.mulf %8, %11 : vector<8x256xf32>
    %c0_4 = arith.constant 0 : index
    %c0_5 = arith.constant 0 : index
    %13 = vector.load %arg2[%c0_4, %c0_5] : memref<8x256xf32, #tpu.memory_space<vmem>>, vector<8x256xf32>
    tpu.vector_store %arg2[%c0_4, %c0_5], %12 {strides = array<i32>} : memref<8x256xf32, #tpu.memory_space<vmem>>, vector<8x256xf32>,
    return
  }
  func.func @transform_0(%arg0: i32) -> (i32, i32) {
    %c0_i32 = arith.constant 0 : i32
    %c0_i32_0 = arith.constant 0 : i32
    return %arg0, %c0_i32 : i32, i32
  }
  func.func @transform_1(%arg0: i32) -> (i32, i32) {
    %c0_i32 = arith.constant 0 : i32
    %c0_i32_0 = arith.constant 0 : i32
    return %arg0, %c0_i32 : i32, i32
  }
}

</mosaic_0001>

<llo_original>
// kernel: tpu_custom_call.1
$region0: #{tpu_custom_call.1}
  #allocation0 [shape = 'u32[]', space=smem, size = 0x4, offset = 0x4, fixed_abs, tag = 'smem constant byte address 0x4 - core index']
  #allocation1 [shape = 'u32[144,128]{1,0:T(1,128)}', space=vmem, size = 0x12000, scoped, tag = 'internal scratch']
  %s0 = inlined_call_operand.hbm [shape: f32[8,256], index: 0, kind: input, shape index: {}]
  %s1 = inlined_call_operand.hbm [shape: f32[8,256], index: 1, kind: output, shape index: {}]
  %s2 = sld [smem:[#allocation0]]
  $region18: #{tpu_custom_call.1} parent=0
    _
  %s4 = ssub.s32 1, %s2
  %s5 = scalar_select 0, %s4, %s2
  $region1: #{tpu_custom_call.1} parent=0
    #allocation2 [shape = 'u8[8192]{0}', space=vmem, size = 0x2000, scoped, tag = 'input window, operand 0, single buffered']
    #allocation3 [shape = 's32[1]{0}', space=sflag, size = 0x4, scoped, tag = 'scoped memory for tpu_custom_call.1']
    #allocation4 [shape = 's32[1]{0}', space=sflag, size = 0x4, scoped, tag = 'scoped memory for tpu_custom_call.1']
    #allocation5 [shape = 'u8[8192]{0}', space=vmem, size = 0x2000, scoped, tag = 'output window, operand 0, single buffered']
    %6 = vsyncpa [#allocation3], 0
    %7 = vsyncpa [#allocation4], 0
    // Predicated region
    $region2: #{tpu_custom_call.1} parent=1 // pred_check
      _
    $region3: #{tpu_custom_call.1} parent=1 // pred_check_branch
      %9 = sbr.rel (0) target = $region5
    $region4: #{tpu_custom_call.1} parent=1 // pred_region
      %s11 = ssub.s32 256, 256
      %12 = vsyncadd [#allocation3], %s11
      %s14 = sshll.u32 [#allocation2], 4
      %s15 = int_to_ptr.vmem [resolvable:$true] %s14
      %17 = dma.hbm_to_vmem [thread:$0]  %s0, 256, %s15, [#allocation3]
    $region5: #{tpu_custom_call.1} parent=1 // pred_fallthru
      _
    // Predicated region
    $region6: #{tpu_custom_call.1} parent=1 // pred_check
      _
    $region7: #{tpu_custom_call.1} parent=1 // pred_check_branch
      %19 = sbr.rel (0) target = $region9
    $region8: #{tpu_custom_call.1} parent=1 // pred_region
      %20 = dma.done [#allocation3], 256
    $region9: #{tpu_custom_call.1} parent=1 // pred_fallthru
      _
    %v21 = vld [vmem:[#allocation2] sm:$0xff]
    %v22 = vld [vmem:[#allocation2 + $0x8] sm:$0xff]
    %v23 = vmul.f32 %v21, 0.035677407
    %v24 = vmul.f32 %v22, 0.035677407
    %v25 = vmul.f32 %v23, %v21
    %v26 = vmul.f32 %v24, %v22
    %v27 = vadd.f32 %v25, 0.7978846
    %v28 = vadd.f32 %v26, 0.7978846
    %v29 = vmul.f32 %v21, %v27
    %v30 = vmul.f32 %v22, %v28
    %v31 = vmul.f32 %v21, 0.5
    %v32 = vmul.f32 %v22, 0.5
    %v33 = vtanh.pop %v29
    %v34 = vtanh.pop %v30
    %v35 = vadd.f32 %v33, 1.0
    %v36 = vadd.f32 %v34, 1.0
    %v37 = vmul.f32 %v31, %v35
    %v38 = vmul.f32 %v32, %v36
    %39 = vst [vmem:[#allocation5] sm:$0xff] %v37
    %40 = vst [vmem:[#allocation5 + $0x8] sm:$0xff] %v38
    // Predicated region
    $region10: #{tpu_custom_call.1} parent=1 // pred_check
      _
    $region11: #{tpu_custom_call.1} parent=1 // pred_check_branch
      %42 = sbr.rel (0) target = $region13
    $region12: #{tpu_custom_call.1} parent=1 // pred_region
      %s44 = ssub.s32 256, 256
      %45 = vsyncadd [#allocation4], %s44
      %s47 = sshll.u32 [#allocation5], 4
      %s48 = int_to_ptr.vmem [resolvable:$true] %s47
      %50 = dma.vmem_to_hbm [thread:$0]  %s48, 256, %s1, [#allocation4]
    $region13: #{tpu_custom_call.1} parent=1 // pred_fallthru
      _
    // Predicated region
    $region14: #{tpu_custom_call.1} parent=1 // pred_check
      _
    $region15: #{tpu_custom_call.1} parent=1 // pred_check_branch
      %52 = sbr.rel (0) target = $region17
    $region16: #{tpu_custom_call.1} parent=1 // pred_region
      %53 = dma.done [#allocation4], 256
    $region17: #{tpu_custom_call.1} parent=1 // pred_fallthru
      _
    %54 = vsyncpa [#allocation3], 1
    %55 = vsyncpa [#allocation4], 1

</llo_original>
